<compile_context>
chip_gen: v6e
topology: v6e:2x2x1
jax: 0.10.0
libtpu: 0.0.40
codegen_flags: <defaults>
</compile_context>

<pallas_src>
import math
from functools import partial

import jax
import jax.numpy as jnp
from jax import lax
from jax.experimental import pallas as pl
from jax.experimental.pallas import tpu as pltpu


def mha_kernel(x_ref, wq_ref, bq_ref, wk_ref, bk_ref, wv_ref, bv_ref,
               wo_ref, bo_ref, o_ref, *, exp_bf16):
    """Grid = (batch_blocks, heads).  One step = one head of one batch block.

    x_ref  : [bb, S, E]   bf16 activations (head-invariant block)
    wq/wk/wv_ref : [1, E, D] bf16 per-head projection weights (scale folded into q)
    bq/bk/bv_ref : [1, 1, D] f32  per-head biases
    wo_ref : [1, D, E]    bf16 per-head slab of the output projection
    bo_ref : [1, E]       f32
    o_ref  : [bb, S, E]   f32 resident accumulator (head axis is "arbitrary")
    """
    h = pl.program_id(1)
    bb, S, E = x_ref.shape
    D = wo_ref.shape[1]

    # leading-dim merge only (lane dim untouched; free when S % 8 == 0)
    x2 = x_ref[...].reshape(bb * S, E)                              # bf16

    def proj(w_ref, b_ref):
        y = lax.dot_general(x2, w_ref[0],
                            dimension_numbers=(((1,), (0,)), ((), ())),
                            preferred_element_type=jnp.float32)     # [bb*S, D]
        return (y + b_ref[0]).reshape(bb, S, D)                     # f32

    q = proj(wq_ref, bq_ref)                 # 1/sqrt(D) already folded in
    k = proj(wk_ref, bk_ref)
    v = proj(wv_ref, bv_ref).astype(jnp.bfloat16)

    # scores: contract head_dim with head_dim, batched over bb.
    # TODO(synk): inspect the Mosaic bundle for a per-step vxpose here; if
    # present, produce K^T directly instead of contracting k's lane axis.
    s = lax.dot_general(q.astype(jnp.bfloat16), k.astype(jnp.bfloat16),
                        dimension_numbers=(((2,), (2,)), ((0,), (0,))),
                        preferred_element_type=jnp.float32)         # [bb, S, S]

    # numerically-stable softmax; bf16 exp only on chips with a bf16 EUP.
    m = jnp.max(s, axis=-1, keepdims=True)
    if exp_bf16:                                                    # v6e / v7x
        p = jnp.exp((s - m).astype(jnp.bfloat16))
        denom = jnp.sum(p.astype(jnp.float32), axis=-1, keepdims=True)
    else:                                                           # v5e / older
        e = jnp.exp(s - m)
        denom = jnp.sum(e, axis=-1, keepdims=True)
        p = e.astype(jnp.bfloat16)

    # un-normalized P @ V, then normalize the small [bb,S,D] result with an
    # exact reciprocal (cheap; avoids dividing the [S,S] weights).
    pv = lax.dot_general(p, v,
                         dimension_numbers=(((2,), (1,)), ((0,), (0,))),
                         preferred_element_type=jnp.float32)        # [bb, S, D]
    head_out = (pv * pl.reciprocal(denom)).astype(jnp.bfloat16)

    # per-head slab of the output projection, accumulated straight into the
    # resident output block (no lane-axis concat of heads).
    # TODO(synk): if the bundle shows MXU fill/drain dominating from K=D,
    # stage head outputs in a VMEM scratch and do one K=E matmul at the
    # last head step instead.
    contrib = lax.dot_general(head_out.reshape(bb * S, D), wo_ref[0],
                              dimension_numbers=(((1,), (0,)), ((), ())),
                              preferred_element_type=jnp.float32
                              ).reshape(bb, S, E)

    @pl.when(h == 0)
    def _init():
        o_ref[...] = jnp.broadcast_to(bo_ref[...], o_ref.shape)

    o_ref[...] += contrib


def multi_head_attention(x, wq, bq, wk, bk, wv, bv, wo, bo, *, num_heads, head_dim):
    """x: [B,S,E] f32. wq/wk/wv: [H,E,D] (pre-transposed, x @ W), bq/bk/bv: [H,D],
    wo: [E,E] (pre-transposed), bo: [E]."""
    B, S, E = x.shape
    H, D = num_heads, head_dim
    assert E == H * D

    # ---- host-side parameter prep (one-time, outside the kernel) ----------
    scale = 1.0 / math.sqrt(D)
    wq_s = (wq * scale).astype(jnp.bfloat16)      # fold attention scale into q
    bq_s = (bq * scale).astype(jnp.float32).reshape(H, 1, D)
    wk_b = wk.astype(jnp.bfloat16)
    bk_f = bk.astype(jnp.float32).reshape(H, 1, D)
    wv_b = wv.astype(jnp.bfloat16)
    bv_f = bv.astype(jnp.float32).reshape(H, 1, D)
    wo_h = wo.reshape(H, D, E).astype(jnp.bfloat16)   # per-head row slabs
    bo_f = bo.astype(jnp.float32).reshape(1, E)

    # ---- device-generation knobs ------------------------------------------
    kind = ""
    try:
        kind = jax.devices()[0].device_kind.lower()
    except Exception:
        pass
    newer_gen = ("v6" in kind) or ("v7" in kind) or ("7x" in kind)
    rows_target = 256 if newer_gen else 128       # MXU M fill: 256 on v6e/v7x
    exp_bf16 = newer_gen                          # bf16 EUP only on v6e/v7x

    # ---- batch blocking: cdiv + pad (no collapse to bb=1 on ragged B) ------
    bb = min(B, max(1, rows_target // S))
    if (("7x" in kind) or ("v7" in kind)) and B >= 2 and pl.cdiv(B, bb) < 2:
        bb = max(1, (B + 1) // 2)                 # keep both v7x TensorCores busy
        # TODO(synk): for B==1 with long S, add a second parallel query-tile axis.
    n_b = pl.cdiv(B, bb)
    B_pad = n_b * bb
    x_p = x if B_pad == B else jnp.pad(x, ((0, B_pad - B), (0, 0), (0, 0)))
    x_bf = x_p.astype(jnp.bfloat16)

    # ---- explicit VMEM budget (sized against v7x's 64 MiB ceiling) ---------
    blk_bytes = (2 * bb * S * E * 2               # x block (double-buffered) bf16
                 + 2 * bb * S * E * 4             # out block f32
                 + 2 * 3 * (E * D * 2 + D * 4)    # wq/wk/wv + biases per head
                 + 2 * (D * E * 2 + E * 4))       # wo slab + bo
    tmp_bytes = (3 * bb * S * S * 4               # scores / exp intermediates
                 + 8 * bb * S * D * 4             # q/k/v/pv/head_out
                 + 2 * bb * S * E * 4)            # per-head contribution
    vmem_limit = int(min(64 * 1024 * 1024,
                         max(16 * 1024 * 1024, 2 * (blk_bytes + tmp_bytes))))

    cost = pl.CostEstimate(
        flops=int(8 * B_pad * S * E * E + 4 * B_pad * S * S * E),
        transcendentals=int(B_pad * H * S * S + B_pad * H * S),
        bytes_accessed=int(x_bf.size * 2 + 3 * H * E * D * 2 + 3 * H * D * 4
                           + E * E * 2 + E * 4 + B_pad * S * E * 4))

    kernel = partial(mha_kernel, exp_bf16=exp_bf16)
    out = pl.pallas_call(
        kernel,
        out_shape=jax.ShapeDtypeStruct((B_pad, S, E), jnp.float32),
        grid=(n_b, H),
        in_specs=[
            pl.BlockSpec((bb, S, E), lambda b, h: (b, 0, 0)),    # x (head-invariant)
            # TODO(synk): on v7x at large E, consider pipeline_mode=pl.Buffered(1)
            # on the weight specs to drop their second VMEM buffer.
            pl.BlockSpec((1, E, D), lambda b, h: (h, 0, 0)),     # wq (scale folded)
            pl.BlockSpec((1, 1, D), lambda b, h: (h, 0, 0)),     # bq
            pl.BlockSpec((1, E, D), lambda b, h: (h, 0, 0)),     # wk
            pl.BlockSpec((1, 1, D), lambda b, h: (h, 0, 0)),     # bk
            pl.BlockSpec((1, E, D), lambda b, h: (h, 0, 0)),     # wv
            pl.BlockSpec((1, 1, D), lambda b, h: (h, 0, 0)),     # bv
            pl.BlockSpec((1, D, E), lambda b, h: (h, 0, 0)),     # wo per-head slab
            pl.BlockSpec((1, E), lambda b, h: (0, 0)),           # bo
        ],
        out_specs=pl.BlockSpec((bb, S, E), lambda b, h: (b, 0, 0)),
        compiler_params=pltpu.CompilerParams(
            dimension_semantics=("parallel", "arbitrary"),
            vmem_limit_bytes=vmem_limit),
        cost_estimate=cost,
    )(x_bf, wq_s, bq_s, wk_b, bk_f, wv_b, bv_f, wo_h, bo_f)

    return out[:B] if B_pad != B else out


def reference_mha(x, wq, bq, wk, bk, wv, bv, wo, bo, *, num_heads, head_dim):
    """Pure-JAX f32 reference mirroring the PyTorch module."""
    outs = []
    for h in range(num_heads):
        q = x @ wq[h] + bq[h]
        k = x @ wk[h] + bk[h]
        v = x @ wv[h] + bv[h]
        scores = jnp.einsum('bsd,btd->bst', q, k) / math.sqrt(head_dim)
        w = jax.nn.softmax(scores, axis=-1)
        outs.append(jnp.einsum('bst,btd->bsd', w, v))
    concat = jnp.concatenate(outs, axis=-1)
    return concat @ wo + bo


if __name__ == "__main__":
    # Small, DistilBERT-like but reduced config: hidden=32, heads=4, head_dim=8
    B, S, E, H = 2, 8, 32, 4
    D = E // H

    key = jax.random.PRNGKey(0)
    ks = jax.random.split(key, 9)
    init = lambda k, shape: (0.02 * jax.random.normal(k, shape)).astype(jnp.float32)

    x = init(ks[0], (B, S, E)) * 50.0                 # hidden_state input
    wq = init(ks[1], (H, E, D))                       # per-head q weight (pre-transposed)
    bq = init(ks[2], (H, D))
    wk = init(ks[3], (H, E, D))
    bk = init(ks[4], (H, D))
    wv = init(ks[5], (H, E, D))
    bv = init(ks[6], (H, D))
    wo = init(ks[7], (E, E))                          # output_linear weight (pre-transposed)
    bo = init(ks[8], (E,))

    out = multi_head_attention(x, wq, bq, wk, bk, wv, bv, wo, bo,
                               num_heads=H, head_dim=D)
    out = jax.block_until_ready(out)

    ref = reference_mha(x, wq, bq, wk, bk, wv, bv, wo, bo,
                        num_heads=H, head_dim=D)
    assert out.shape == (B, S, E)
    # bf16 MXU operands vs f32 reference -> relaxed tolerance
    assert jnp.allclose(out, ref, atol=1e-2, rtol=1e-2), (
        "mismatch vs JAX reference, max abs diff = "
        f"{float(jnp.max(jnp.abs(out - ref)))}")

    print("KERNEL_OK")
</pallas_src>

<mosaic_0001>
module attributes {stable_mosaic.version = 11 : i64} {
  func.func @mha_kernel(%arg0: i32, %arg1: i32, %arg2: memref<2x8x32xbf16, #tpu.memory_space<vmem>>, %arg3: memref<1x32x8xbf16, #tpu.memory_space<vmem>>, %arg4: memref<1x1x8xf32, #tpu.memory_space<vmem>>, %arg5: memref<1x32x8xbf16, #tpu.memory_space<vmem>>, %arg6: memref<1x1x8xf32, #tpu.memory_space<vmem>>, %arg7: memref<1x32x8xbf16, #tpu.memory_space<vmem>>, %arg8: memref<1x1x8xf32, #tpu.memory_space<vmem>>, %arg9: memref<1x8x32xbf16, #tpu.memory_space<vmem>>, %arg10: memref<1x32xf32, #tpu.memory_space<vmem>>, %arg11: memref<2x8x32xf32, #tpu.memory_space<vmem>>) attributes {dimension_semantics = [#tpu.dimension_semantics<parallel>, #tpu.dimension_semantics<arbitrary>], iteration_bounds = array<i64: 1, 4>, scalar_prefetch = 0 : i64, scratch_operands = 0 : i64, tpu.core_type = #tpu.core_type<tc>, window_params = [{transform_indices = @transform_0, window_bounds = array<i64: 2, 8, 32>}, {transform_indices = @transform_1, window_bounds = array<i64: 1, 32, 8>}, {transform_indices = @transform_2, window_bounds = array<i64: 1, 1, 8>}, {transform_indices = @transform_3, window_bounds = array<i64: 1, 32, 8>}, {transform_indices = @transform_4, window_bounds = array<i64: 1, 1, 8>}, {transform_indices = @transform_5, window_bounds = array<i64: 1, 32, 8>}, {transform_indices = @transform_6, window_bounds = array<i64: 1, 1, 8>}, {transform_indices = @transform_7, window_bounds = array<i64: 1, 8, 32>}, {pipeline_mode = #tpu.pipeline_mode<synchronous>, transform_indices = @transform_8, window_bounds = array<i64: 1, 32>}, {transform_indices = @transform_9, window_bounds = array<i64: 2, 8, 32>}]} {
    %c0 = arith.constant 0 : index
    %c0_0 = arith.constant 0 : index
    %c0_1 = arith.constant 0 : index
    %0 = vector.load %arg2[%c0, %c0_0, %c0_1] : memref<2x8x32xbf16, #tpu.memory_space<vmem>>, vector<2x8x32xbf16>
    %1 = vector.shape_cast %0 : vector<2x8x32xbf16> to vector<16x32xbf16>
    %c0_2 = arith.constant 0 : index
    %c0_3 = arith.constant 0 : index
    %c0_4 = arith.constant 0 : index
    %2 = vector.load %arg3[%c0_2, %c0_3, %c0_4] : memref<1x32x8xbf16, #tpu.memory_space<vmem>>, vector<1x32x8xbf16>
    %3 = vector.shape_cast %2 : vector<1x32x8xbf16> to vector<32x8xbf16>
    %cst = arith.constant dense<0.000000e+00> : vector<16x8xf32>
    %4 = tpu.matmul %1, %3, %cst {dimension_numbers = #tpu.dot_dimension_numbers<[1], [0], [0], [1], [0, 0, 1, 1], [], []>} : vector<16x32xbf16>, vector<32x8xbf16>, vector<16x8xf32> -> vector<16x8xf32>
    %c0_5 = arith.constant 0 : index
    %c0_6 = arith.constant 0 : index
    %c0_7 = arith.constant 0 : index
    %5 = vector.load %arg4[%c0_5, %c0_6, %c0_7] : memref<1x1x8xf32, #tpu.memory_space<vmem>>, vector<1x1x8xf32>
    %6 = vector.shape_cast %5 : vector<1x1x8xf32> to vector<1x8xf32>
    %7 = vector.broadcast %6 : vector<1x8xf32> to vector<16x8xf32>
    %8 = arith.addf %4, %7 : vector<16x8xf32>
    %9 = vector.shape_cast %8 : vector<16x8xf32> to vector<2x8x8xf32>
    %c0_8 = arith.constant 0 : index
    %c0_9 = arith.constant 0 : index
    %c0_10 = arith.constant 0 : index
    %10 = vector.load %arg5[%c0_8, %c0_9, %c0_10] : memref<1x32x8xbf16, #tpu.memory_space<vmem>>, vector<1x32x8xbf16>
    %11 = vector.shape_cast %10 : vector<1x32x8xbf16> to vector<32x8xbf16>
    %cst_11 = arith.constant dense<0.000000e+00> : vector<16x8xf32>
    %12 = tpu.matmul %1, %11, %cst_11 {dimension_numbers = #tpu.dot_dimension_numbers<[1], [0], [0], [1], [0, 0, 1, 1], [], []>} : vector<16x32xbf16>, vector<32x8xbf16>, vector<16x8xf32> -> vector<16x8xf32>
    %c0_12 = arith.constant 0 : index
    %c0_13 = arith.constant 0 : index
    %c0_14 = arith.constant 0 : index
    %13 = vector.load %arg6[%c0_12, %c0_13, %c0_14] : memref<1x1x8xf32, #tpu.memory_space<vmem>>, vector<1x1x8xf32>
    %14 = vector.shape_cast %13 : vector<1x1x8xf32> to vector<1x8xf32>
    %15 = vector.broadcast %14 : vector<1x8xf32> to vector<16x8xf32>
    %16 = arith.addf %12, %15 : vector<16x8xf32>
    %17 = vector.shape_cast %16 : vector<16x8xf32> to vector<2x8x8xf32>
    %c0_15 = arith.constant 0 : index
    %c0_16 = arith.constant 0 : index
    %c0_17 = arith.constant 0 : index
    %18 = vector.load %arg7[%c0_15, %c0_16, %c0_17] : memref<1x32x8xbf16, #tpu.memory_space<vmem>>, vector<1x32x8xbf16>
    %19 = vector.shape_cast %18 : vector<1x32x8xbf16> to vector<32x8xbf16>
    %cst_18 = arith.constant dense<0.000000e+00> : vector<16x8xf32>
    %20 = tpu.matmul %1, %19, %cst_18 {dimension_numbers = #tpu.dot_dimension_numbers<[1], [0], [0], [1], [0, 0, 1, 1], [], []>} : vector<16x32xbf16>, vector<32x8xbf16>, vector<16x8xf32> -> vector<16x8xf32>
    %c0_19 = arith.constant 0 : index
    %c0_20 = arith.constant 0 : index
    %c0_21 = arith.constant 0 : index
    %21 = vector.load %arg8[%c0_19, %c0_20, %c0_21] : memref<1x1x8xf32, #tpu.memory_space<vmem>>, vector<1x1x8xf32>
    %22 = vector.shape_cast %21 : vector<1x1x8xf32> to vector<1x8xf32>
    %23 = vector.broadcast %22 : vector<1x8xf32> to vector<16x8xf32>
    %24 = arith.addf %20, %23 : vector<16x8xf32>
    %25 = vector.shape_cast %24 : vector<16x8xf32> to vector<2x8x8xf32>
    %26 = arith.truncf %25 : vector<2x8x8xf32> to vector<2x8x8xbf16>
    %27 = arith.truncf %9 : vector<2x8x8xf32> to vector<2x8x8xbf16>
    %28 = arith.truncf %17 : vector<2x8x8xf32> to vector<2x8x8xbf16>
    %cst_22 = arith.constant dense<0.000000e+00> : vector<2x8x8xf32>
    %29 = tpu.matmul %27, %28, %cst_22 {dimension_numbers = #tpu.dot_dimension_numbers<[2], [2], [1], [1], [0, 0, 0, 1, 1, 1], [0], [0]>} : vector<2x8x8xbf16>, vector<2x8x8xbf16>, vector<2x8x8xf32> -> vector<2x8x8xf32>
    %cst_23 = arith.constant dense<0xFF800000> : vector<2x8xf32>
    %30 = vector.multi_reduction <maximumf>, %29, %cst_23 [2] : vector<2x8x8xf32> to vector<2x8xf32>
    %31 = vector.shape_cast %30 : vector<2x8xf32> to vector<2x8x1xf32>
    %32 = vector.broadcast %31 : vector<2x8x1xf32> to vector<2x8x8xf32>
    %33 = arith.subf %29, %32 : vector<2x8x8xf32>
    %34 = math.exp %33 : vector<2x8x8xf32>
    %cst_24 = arith.constant dense<0.000000e+00> : vector<2x8xf32>
    %35 = vector.multi_reduction <add>, %34, %cst_24 [2] : vector<2x8x8xf32> to vector<2x8xf32>
    %36 = vector.shape_cast %35 : vector<2x8xf32> to vector<2x8x1xf32>
    %37 = arith.truncf %34 : vector<2x8x8xf32> to vector<2x8x8xbf16>
    %cst_25 = arith.constant dense<0.000000e+00> : vector<2x8x8xf32>
    %38 = tpu.matmul %37, %26, %cst_25 {dimension_numbers = #tpu.dot_dimension_numbers<[2], [1], [1], [2], [0, 0, 0, 1, 1, 2], [0], [0]>} : vector<2x8x8xbf16>, vector<2x8x8xbf16>, vector<2x8x8xf32> -> vector<2x8x8xf32>
    %39 = tpu.reciprocal %36 : vector<2x8x1xf32> -> vector<2x8x1xf32>
    %40 = vector.broadcast %39 : vector<2x8x1xf32> to vector<2x8x8xf32>
    %41 = arith.mulf %38, %40 : vector<2x8x8xf32>
    %42 = arith.truncf %41 : vector<2x8x8xf32> to vector<2x8x8xbf16>
    %43 = vector.shape_cast %42 : vector<2x8x8xbf16> to vector<16x8xbf16>
    %c0_26 = arith.constant 0 : index
    %c0_27 = arith.constant 0 : index
    %c0_28 = arith.constant 0 : index
    %44 = vector.load %arg9[%c0_26, %c0_27, %c0_28] : memref<1x8x32xbf16, #tpu.memory_space<vmem>>, vector<1x8x32xbf16>
    %45 = vector.shape_cast %44 : vector<1x8x32xbf16> to vector<8x32xbf16>
    %cst_29 = arith.constant dense<0.000000e+00> : vector<16x32xf32>
    %46 = tpu.matmul %43, %45, %cst_29 {dimension_numbers = #tpu.dot_dimension_numbers<[1], [0], [0], [1], [0, 0, 1, 1], [], []>} : vector<16x8xbf16>, vector<8x32xbf16>, vector<16x32xf32> -> vector<16x32xf32>
    %47 = vector.shape_cast %46 : vector<16x32xf32> to vector<2x8x32xf32>
    %c0_i32 = arith.constant 0 : i32
    %48 = arith.cmpi eq, %arg1, %c0_i32 : i32
    %49 = arith.extui %48 : i1 to i32
    %c0_i32_30 = arith.constant 0 : i32
    %50 = arith.cmpi ne, %49, %c0_i32_30 : i32
    scf.if %50 {
      %c0_37 = arith.constant 0 : index
      %c0_38 = arith.constant 0 : index
      %54 = vector.load %arg10[%c0_37, %c0_38] : memref<1x32xf32, #tpu.memory_space<vmem>>, vector<1x32xf32>
      %55 = vector.shape_cast %54 : vector<1x32xf32> to vector<1x1x32xf32>
      %56 = vector.broadcast %55 : vector<1x1x32xf32> to vector<2x8x32xf32>
      %c0_39 = arith.constant 0 : index
      %c0_40 = arith.constant 0 : index
      %c0_41 = arith.constant 0 : index
      %57 = vector.load %arg11[%c0_39, %c0_40, %c0_41] : memref<2x8x32xf32, #tpu.memory_space<vmem>>, vector<2x8x32xf32>
      tpu.vector_store %arg11[%c0_39, %c0_40, %c0_41], %56 {strides = array<i32>} : memref<2x8x32xf32, #tpu.memory_space<vmem>>, vector<2x8x32xf32>,
    } else {
    }
    %c0_31 = arith.constant 0 : index
    %c0_32 = arith.constant 0 : index
    %c0_33 = arith.constant 0 : index
    %51 = vector.load %arg11[%c0_31, %c0_32, %c0_33] : memref<2x8x32xf32, #tpu.memory_space<vmem>>, vector<2x8x32xf32>
    %52 = arith.addf %51, %47 : vector<2x8x32xf32>
    %c0_34 = arith.constant 0 : index
    %c0_35 = arith.constant 0 : index
    %c0_36 = arith.constant 0 : index
    %53 = vector.load %arg11[%c0_34, %c0_35, %c0_36] : memref<2x8x32xf32, #tpu.memory_space<vmem>>, vector<2x8x32xf32>
    tpu.vector_store %arg11[%c0_34, %c0_35, %c0_36], %52 {strides = array<i32>} : memref<2x8x32xf32, #tpu.memory_space<vmem>>, vector<2x8x32xf32>,
    return
  }
  func.func @transform_0(%arg0: i32, %arg1: i32) -> (i32, i32, i32) {
    %c0_i32 = arith.constant 0 : i32
    %c0_i32_0 = arith.constant 0 : i32
    %c0_i32_1 = arith.constant 0 : i32
    return %arg0, %c0_i32, %c0_i32_0 : i32, i32, i32
  }
  func.func @transform_1(%arg0: i32, %arg1: i32) -> (i32, i32, i32) {
    %c0_i32 = arith.constant 0 : i32
    %c0_i32_0 = arith.constant 0 : i32
    %c0_i32_1 = arith.constant 0 : i32
    return %arg1, %c0_i32, %c0_i32_0 : i32, i32, i32
  }
  func.func @transform_2(%arg0: i32, %arg1: i32) -> (i32, i32, i32) {
    %c0_i32 = arith.constant 0 : i32
    %c0_i32_0 = arith.constant 0 : i32
    %c0_i32_1 = arith.constant 0 : i32
    return %arg1, %c0_i32, %c0_i32_0 : i32, i32, i32
  }
  func.func @transform_3(%arg0: i32, %arg1: i32) -> (i32, i32, i32) {
    %c0_i32 = arith.constant 0 : i32
    %c0_i32_0 = arith.constant 0 : i32
    %c0_i32_1 = arith.constant 0 : i32
    return %arg1, %c0_i32, %c0_i32_0 : i32, i32, i32
  }
  func.func @transform_4(%arg0: i32, %arg1: i32) -> (i32, i32, i32) {
    %c0_i32 = arith.constant 0 : i32
    %c0_i32_0 = arith.constant 0 : i32
    %c0_i32_1 = arith.constant 0 : i32
    return %arg1, %c0_i32, %c0_i32_0 : i32, i32, i32
  }
  func.func @transform_5(%arg0: i32, %arg1: i32) -> (i32, i32, i32) {
    %c0_i32 = arith.constant 0 : i32
    %c0_i32_0 = arith.constant 0 : i32
    %c0_i32_1 = arith.constant 0 : i32
    return %arg1, %c0_i32, %c0_i32_0 : i32, i32, i32
  }
  func.func @transform_6(%arg0: i32, %arg1: i32) -> (i32, i32, i32) {
    %c0_i32 = arith.constant 0 : i32
    %c0_i32_0 = arith.constant 0 : i32
    %c0_i32_1 = arith.constant 0 : i32
    return %arg1, %c0_i32, %c0_i32_0 : i32, i32, i32
  }
  func.func @transform_7(%arg0: i32, %arg1: i32) -> (i32, i32, i32) {
    %c0_i32 = arith.constant 0 : i32
    %c0_i32_0 = arith.constant 0 : i32
    %c0_i32_1 = arith.constant 0 : i32
    return %arg1, %c0_i32, %c0_i32_0 : i32, i32, i32
  }
  func.func @transform_8(%arg0: i32, %arg1: i32) -> (i32, i32) {
    %c0_i32 = arith.constant 0 : i32
    %c0_i32_0 = arith.constant 0 : i32
    %c0_i32_1 = arith.constant 0 : i32
    return %c0_i32, %c0_i32_0 : i32, i32
  }
  func.func @transform_9(%arg0: i32, %arg1: i32) -> (i32, i32, i32) {
    %c0_i32 = arith.constant 0 : i32
    %c0_i32_0 = arith.constant 0 : i32
    %c0_i32_1 = arith.constant 0 : i32
    return %arg0, %c0_i32, %c0_i32_0 : i32, i32, i32
  }
}

</mosaic_0001>

<llo_original>
// kernel: tpu_custom_call.1
$region0: #{tpu_custom_call.1}
  #allocation0 [shape = 'u32[]', space=smem, size = 0x4, offset = 0x4, fixed_abs, tag = 'smem constant byte address 0x4 - core index']
  #allocation1 [shape = 'u32[144,128]{1,0:T(1,128)}', space=vmem, size = 0x12000, scoped, tag = 'internal scratch']
  %s0 = inlined_call_operand.vmem [shape: bf16[2,8,32], index: 0, kind: input, shape index: {}]
  %s1 = inlined_call_operand.vmem [shape: bf16[4,32,8], index: 1, kind: input, shape index: {}]
  %s2 = inlined_call_operand.vmem [shape: f32[4,1,8], index: 2, kind: input, shape index: {}]
  %s3 = inlined_call_operand.vmem [shape: bf16[4,32,8], index: 3, kind: input, shape index: {}]
  %s4 = inlined_call_operand.vmem [shape: f32[4,1,8], index: 4, kind: input, shape index: {}]
  %s5 = inlined_call_operand.vmem [shape: bf16[4,32,8], index: 5, kind: input, shape index: {}]
  %s6 = inlined_call_operand.vmem [shape: f32[4,1,8], index: 6, kind: input, shape index: {}]
  %s7 = inlined_call_operand.vmem [shape: bf16[4,8,32], index: 7, kind: input, shape index: {}]
  %s8 = inlined_call_operand.vmem [shape: f32[1,32], index: 8, kind: input, shape index: {}]
  %s9 = inlined_call_operand.hbm [shape: f32[2,8,32], index: 9, kind: output, shape index: {}]
  %s10 = sld [smem:[#allocation0]]
  $region73: #{tpu_custom_call.1} parent=0
    _
  %s12 = ssub.s32 1, %s10
  %s13 = scalar_select 0, %s12, %s10
  $region1: #{tpu_custom_call.1} parent=0
    #allocation2 [shape = 'u8[8192]{0}', space=vmem, size = 0x2000, scoped, tag = 'output window, operand 0, single buffered']
    #allocation3 [shape = 's32[2]{0}', space=sflag, size = 0x8, scoped, tag = 'scoped memory for tpu_custom_call.1']
    %14 = vsyncpa [#allocation3], 0
    loop: start=0, step=1, limit=6
    $region2: #{tpu_custom_call.1} parent=1 // loop_pre_header
      _
    $region3: #{tpu_custom_call.1} parent=1 // loop_header
      %s16 = sphi 0, %s20
      %p17 = scmp.ge.s32.totalorder %s16, 6
      %s23 = sphi 0, %s35
      %s24 = sphi 0, %s31
      %s25 = sphi 0, %s23
      %s26 = sphi 0, %s24
      %s27 = sphi 0, %s25
      %s28 = sphi 0, %s26
      %s38 = sphi 0, %s40
      %s41 = sphi 0, %s38
      %s42 = sphi 0, %s41
      %s58 = sphi 0, %s42
      %s64 = sphi 0, %s66
      %s67 = sphi 0, %s64
      %s68 = sphi 0, %s67
      %s84 = sphi 0, %s68
      %s90 = sphi 0, %s92
      %s93 = sphi 0, %s90
      %s94 = sphi 0, %s93
      %s110 = sphi 0, %s94
      %s116 = sphi 0, %s118
      %s119 = sphi 0, %s116
      %s120 = sphi 0, %s119
      %s136 = sphi 0, %s120
      %s142 = sphi 0, %s144
      %s145 = sphi 0, %s142
      %s146 = sphi 0, %s145
      %s162 = sphi 0, %s146
      %s168 = sphi 0, %s170
      %s171 = sphi 0, %s168
      %s172 = sphi 0, %s171
      %s188 = sphi 0, %s172
      %s194 = sphi 0, %s196
      %s197 = sphi 0, %s194
      %s198 = sphi 0, %s197
      %s214 = sphi 0, %s198
      %s220 = sphi 0, %s222
      %s223 = sphi 0, %s220
      %s224 = sphi 0, %s223
      %s240 = sphi 0, %s224
      %s244 = sphi 0, %s244
      %s246 = sphi 0, %s244
      %s247 = sphi 0, %s246
      %s261 = sphi 0, %s247
      %s267 = sphi 0, %s269
      %s270 = sphi 0, %s267
      %s271 = sphi 0, %s270
      %s287 = sphi 0, %s271
    $region4: #{tpu_custom_call.1} parent=1 // loop_header_branch
      %19 = sbr.rel (%p17) target = $region8
    $region5: #{tpu_custom_call.1} parent=1 // loop_body
      %s21 = ssub.s32 %s16, 1
      %s22 = ssub.s32 %s16, 2
      %s29 = sadd.s32 1, %s24
      %p30 = scmp.ge.s32.totalorder %s29, 4
      %s31 = scalar_select %p30, 0, %s29
      %s32 = sadd.s32 1, %s23
      %s33 = scalar_select %p30, %s32, %s23
      %p34 = scmp.ge.s32.totalorder %s33, 1
      %s35 = scalar_select %p34, 0, %s33
      %s36 = ssub.s32 %s23, %s35
      %p37 = scmp.eq.s32.totalorder %s36, 0
      %s39 = sadd.s32 %s38, 1
      %s40 = scalar_select %p37, %s38, %s39
      %p43 = pneg %p37
      %p44 = scmp.eq.s32.totalorder %s16, 3
      %p45 = por %p43, %p44
      %p46 = scmp.ne.s32.totalorder %s38, %s41
      %p47 = scmp.eq.s32.totalorder %s16, 0
      %p48 = por %p46, %p47
      %p49 = scmp.ne.s32.totalorder %s38, %s41
      %p50 = scmp.eq.s32.totalorder %s21, 3
      %p51 = por %p49, %p50
      %p52 = scmp.ne.s32.totalorder %s41, %s42
      %p53 = scmp.eq.s32.totalorder %s21, 0
      %p54 = por %p52, %p53
      %p55 = scmp.ne.s32.totalorder %s41, %s42
      %p56 = scmp.eq.s32.totalorder %s22, 3
      %p57 = por %p55, %p56
      %p59 = scmp.ne.s32.totalorder %s42, %s58
      %p60 = scmp.eq.s32.totalorder %s22, 0
      %p61 = por %p59, %p60
      %s62 = ssub.s32 %s24, %s31
      %p63 = scmp.eq.s32.totalorder %s62, 0
      %s65 = sadd.s32 %s64, 1
      %s66 = scalar_select %p63, %s64, %s65
      %p69 = pneg %p63
      %p70 = scmp.eq.s32.totalorder %s16, 3
      %p71 = por %p69, %p70
      %p72 = scmp.ne.s32.totalorder %s64, %s67
      %p73 = scmp.eq.s32.totalorder %s16, 0
      %p74 = por %p72, %p73
      %p75 = scmp.ne.s32.totalorder %s64, %s67
      %p76 = scmp.eq.s32.totalorder %s21, 3
      %p77 = por %p75, %p76
      %p78 = scmp.ne.s32.totalorder %s67, %s68
      %p79 = scmp.eq.s32.totalorder %s21, 0
      %p80 = por %p78, %p79
      %p81 = scmp.ne.s32.totalorder %s67, %s68
      %p82 = scmp.eq.s32.totalorder %s22, 3
      %p83 = por %p81, %p82
      %p85 = scmp.ne.s32.totalorder %s68, %s84
      %p86 = scmp.eq.s32.totalorder %s22, 0
      %p87 = por %p85, %p86
      %s88 = ssub.s32 %s24, %s31
      %p89 = scmp.eq.s32.totalorder %s88, 0
      %s91 = sadd.s32 %s90, 1
      %s92 = scalar_select %p89, %s90, %s91
      %p95 = pneg %p89
      %p96 = scmp.eq.s32.totalorder %s16, 3
      %p97 = por %p95, %p96
      %p98 = scmp.ne.s32.totalorder %s90, %s93
      %p99 = scmp.eq.s32.totalorder %s16, 0
      %p100 = por %p98, %p99
      %p101 = scmp.ne.s32.totalorder %s90, %s93
      %p102 = scmp.eq.s32.totalorder %s21, 3
      %p103 = por %p101, %p102
      %p104 = scmp.ne.s32.totalorder %s93, %s94
      %p105 = scmp.eq.s32.totalorder %s21, 0
      %p106 = por %p104, %p105
      %p107 = scmp.ne.s32.totalorder %s93, %s94
      %p108 = scmp.eq.s32.totalorder %s22, 3
      %p109 = por %p107, %p108
      %p111 = scmp.ne.s32.totalorder %s94, %s110
      %p112 = scmp.eq.s32.totalorder %s22, 0
      %p113 = por %p111, %p112
      %s114 = ssub.s32 %s24, %s31
      %p115 = scmp.eq.s32.totalorder %s114, 0
      %s117 = sadd.s32 %s116, 1
      %s118 = scalar_select %p115, %s116, %s117
      %p121 = pneg %p115
      %p122 = scmp.eq.s32.totalorder %s16, 3
      %p123 = por %p121, %p122
      %p124 = scmp.ne.s32.totalorder %s116, %s119
      %p125 = scmp.eq.s32.totalorder %s16, 0
      %p126 = por %p124, %p125
      %p127 = scmp.ne.s32.totalorder %s116, %s119
      %p128 = scmp.eq.s32.totalorder %s21, 3
      %p129 = por %p127, %p128
      %p130 = scmp.ne.s32.totalorder %s119, %s120
      %p131 = scmp.eq.s32.totalorder %s21, 0
      %p132 = por %p130, %p131
      %p133 = scmp.ne.s32.totalorder %s119, %s120
      %p134 = scmp.eq.s32.totalorder %s22, 3
      %p135 = por %p133, %p134
      %p137 = scmp.ne.s32.totalorder %s120, %s136
      %p138 = scmp.eq.s32.totalorder %s22, 0
      %p139 = por %p137, %p138
      %s140 = ssub.s32 %s24, %s31
      %p141 = scmp.eq.s32.totalorder %s140, 0
      %s143 = sadd.s32 %s142, 1
      %s144 = scalar_select %p141, %s142, %s143
      %p147 = pneg %p141
      %p148 = scmp.eq.s32.totalorder %s16, 3
      %p149 = por %p147, %p148
      %p150 = scmp.ne.s32.totalorder %s142, %s145
      %p151 = scmp.eq.s32.totalorder %s16, 0
      %p152 = por %p150, %p151
      %p153 = scmp.ne.s32.totalorder %s142, %s145
      %p154 = scmp.eq.s32.totalorder %s21, 3
      %p155 = por %p153, %p154
      %p156 = scmp.ne.s32.totalorder %s145, %s146
      %p157 = scmp.eq.s32.totalorder %s21, 0
      %p158 = por %p156, %p157
      %p159 = scmp.ne.s32.totalorder %s145, %s146
      %p160 = scmp.eq.s32.totalorder %s22, 3
      %p161 = por %p159, %p160
      %p163 = scmp.ne.s32.totalorder %s146, %s162
      %p164 = scmp.eq.s32.totalorder %s22, 0
      %p165 = por %p163, %p164
      %s166 = ssub.s32 %s24, %s31
      %p167 = scmp.eq.s32.totalorder %s166, 0
      %s169 = sadd.s32 %s168, 1
      %s170 = scalar_select %p167, %s168, %s169
      %p173 = pneg %p167
      %p174 = scmp.eq.s32.totalorder %s16, 3
      %p175 = por %p173, %p174
      %p176 = scmp.ne.s32.totalorder %s168, %s171
      %p177 = scmp.eq.s32.totalorder %s16, 0
      %p178 = por %p176, %p177
      %p179 = scmp.ne.s32.totalorder %s168, %s171
      %p180 = scmp.eq.s32.totalorder %s21, 3
      %p181 = por %p179, %p180
      %p182 = scmp.ne.s32.totalorder %s171, %s172
      %p183 = scmp.eq.s32.totalorder %s21, 0
      %p184 = por %p182, %p183
      %p185 = scmp.ne.s32.totalorder %s171, %s172
      %p186 = scmp.eq.s32.totalorder %s22, 3
      %p187 = por %p185, %p186
      %p189 = scmp.ne.s32.totalorder %s172, %s188
      %p190 = scmp.eq.s32.totalorder %s22, 0
      %p191 = por %p189, %p190
      %s192 = ssub.s32 %s24, %s31
      %p193 = scmp.eq.s32.totalorder %s192, 0
      %s195 = sadd.s32 %s194, 1
      %s196 = scalar_select %p193, %s194, %s195
      %p199 = pneg %p193
      %p200 = scmp.eq.s32.totalorder %s16, 3
      %p201 = por %p199, %p200
      %p202 = scmp.ne.s32.totalorder %s194, %s197
      %p203 = scmp.eq.s32.totalorder %s16, 0
      %p204 = por %p202, %p203
      %p205 = scmp.ne.s32.totalorder %s194, %s197
      %p206 = scmp.eq.s32.totalorder %s21, 3
      %p207 = por %p205, %p206
      %p208 = scmp.ne.s32.totalorder %s197, %s198
      %p209 = scmp.eq.s32.totalorder %s21, 0
      %p210 = por %p208, %p209
      %p211 = scmp.ne.s32.totalorder %s197, %s198
      %p212 = scmp.eq.s32.totalorder %s22, 3
      %p213 = por %p211, %p212
      %p215 = scmp.ne.s32.totalorder %s198, %s214
      %p216 = scmp.eq.s32.totalorder %s22, 0
      %p217 = por %p215, %p216
      %s218 = ssub.s32 %s24, %s31
      %p219 = scmp.eq.s32.totalorder %s218, 0
      %s221 = sadd.s32 %s220, 1
      %s222 = scalar_select %p219, %s220, %s221
      %p225 = pneg %p219
      %p226 = scmp.eq.s32.totalorder %s16, 3
      %p227 = por %p225, %p226
      %p228 = scmp.ne.s32.totalorder %s220, %s223
      %p229 = scmp.eq.s32.totalorder %s16, 0
      %p230 = por %p228, %p229
      %p231 = scmp.ne.s32.totalorder %s220, %s223
      %p232 = scmp.eq.s32.totalorder %s21, 3
      %p233 = por %p231, %p232
      %p234 = scmp.ne.s32.totalorder %s223, %s224
      %p235 = scmp.eq.s32.totalorder %s21, 0
      %p236 = por %p234, %p235
      %p237 = scmp.ne.s32.totalorder %s223, %s224
      %p238 = scmp.eq.s32.totalorder %s22, 3
      %p239 = por %p237, %p238
      %p241 = scmp.ne.s32.totalorder %s224, %s240
      %p242 = scmp.eq.s32.totalorder %s22, 0
      %p243 = por %p241, %p242
      %s245 = sadd.s32 %s244, 1
      %p248 = scmp.eq.s32.totalorder %s16, 3
      %p249 = scmp.ne.s32.totalorder %s244, %s246
      %p250 = scmp.eq.s32.totalorder %s16, 0
      %p251 = por %p249, %p250
      %p252 = scmp.ne.s32.totalorder %s244, %s246
      %p253 = scmp.eq.s32.totalorder %s21, 3
      %p254 = por %p252, %p253
      %p255 = scmp.ne.s32.totalorder %s246, %s247
      %p256 = scmp.eq.s32.totalorder %s21, 0
      %p257 = por %p255, %p256
      %p258 = scmp.ne.s32.totalorder %s246, %s247
      %p259 = scmp.eq.s32.totalorder %s22, 3
      %p260 = por %p258, %p259
      %p262 = scmp.ne.s32.totalorder %s247, %s261
      %p263 = scmp.eq.s32.totalorder %s22, 0
      %p264 = por %p262, %p263
      %s265 = ssub.s32 %s23, %s35
      %p266 = scmp.eq.s32.totalorder %s265, 0
      %s268 = sadd.s32 %s267, 1
      %s269 = scalar_select %p266, %s267, %s268
      %p272 = pneg %p266
      %p273 = scmp.eq.s32.totalorder %s16, 3
      %p274 = por %p272, %p273
      %p275 = scmp.ne.s32.totalorder %s267, %s270
      %p276 = scmp.eq.s32.totalorder %s16, 0
      %p277 = por %p275, %p276
      %p278 = scmp.ne.s32.totalorder %s267, %s270
      %p279 = scmp.eq.s32.totalorder %s21, 3
      %p280 = por %p278, %p279
      %p281 = scmp.ne.s32.totalorder %s270, %s271
      %p282 = scmp.eq.s32.totalorder %s21, 0
      %p283 = por %p281, %p282
      %p284 = scmp.ne.s32.totalorder %s270, %s271
      %p285 = scmp.eq.s32.totalorder %s22, 3
      %p286 = por %p284, %p285
      %p288 = scmp.ne.s32.totalorder %s271, %s287
      %p289 = scmp.eq.s32.totalorder %s22, 0
      %p290 = por %p288, %p289
      %p291 = scmp.le.s32.totalorder 1, %s16
      %p292 = scmp.lt.s32.totalorder %s16, 5
      %p293 = pnand %p291, %p292
      %p294 = pneg %p293
      // Predicated region
      $region9: #{tpu_custom_call.1} parent=5 // pred_check
        _
      $region10: #{tpu_custom_call.1} parent=5 // pred_check_branch
        %296 = sbr.rel (%p293) target = $region12
      $region11: #{tpu_custom_call.1} parent=5 // pred_region
        %s297 = ssub.s32 %s16, 1
        // Predicated region
        $region13: #{tpu_custom_call.1} parent=11 // pred_check
          %p298 = pneg %p54
        $region14: #{tpu_custom_call.1} parent=11 // pred_check_branch
          %300 = sbr.rel (%p298) target = $region16
        $region15: #{tpu_custom_call.1} parent=11 // pred_region
          %s301 = smul.u32 2, %s25
          %p302 = scmp.lt.s32.totalorder %s301, 1
          %s303 = scalar_select %p302, %s301, 1
          %s304 = smul.addr %s303, 4
          %s305 = scalar_lea.vmem %s0, %s304
          %s306 = smul.u32 2, %s25
        $region16: #{tpu_custom_call.1} parent=11 // pred_fallthru
          _
        // Predicated region
        $region17: #{tpu_custom_call.1} parent=11 // pred_check
          %p307 = pneg %p257
        $region18: #{tpu_custom_call.1} parent=11 // pred_check_branch
          %309 = sbr.rel (%p307) target = $region20
        $region19: #{tpu_custom_call.1} parent=11 // pred_region
          _
        $region20: #{tpu_custom_call.1} parent=11 // pred_fallthru
          _
      $region12: #{tpu_custom_call.1} parent=5 // pred_fallthru
        _
      %p310 = scmp.lt.s32.totalorder %s16, 4
      // Predicated region
      $region21: #{tpu_custom_call.1} parent=5 // pred_check
        %p311 = pneg %p310
      $region22: #{tpu_custom_call.1} parent=5 // pred_check_branch
        %313 = sbr.rel (%p311) target = $region24
      $region23: #{tpu_custom_call.1} parent=5 // pred_region
        // Predicated region
        $region25: #{tpu_custom_call.1} parent=23 // pred_check
          %p314 = pneg %p74
        $region26: #{tpu_custom_call.1} parent=23 // pred_check_branch
          %316 = sbr.rel (%p314) target = $region28
        $region27: #{tpu_custom_call.1} parent=23 // pred_region
          %p317 = scmp.lt.s32.totalorder %s24, 3
          %s318 = scalar_select %p317, %s24, 3
          %s319 = smul.addr %s318, 4
          %s320 = smul.addr %s319, 4
          %s321 = scalar_lea.vmem %s1, %s320
        $region28: #{tpu_custom_call.1} parent=23 // pred_fallthru
          _
        // Predicated region
        $region29: #{tpu_custom_call.1} parent=23 // pred_check
          %p322 = pneg %p100
        $region30: #{tpu_custom_call.1} parent=23 // pred_check_branch
          %324 = sbr.rel (%p322) target = $region32
        $region31: #{tpu_custom_call.1} parent=23 // pred_region
          %p325 = scmp.lt.s32.totalorder %s24, 3
          %s326 = scalar_select %p325, %s24, 3
          %s327 = scalar_lea.vmem %s2, %s326
        $region32: #{tpu_custom_call.1} parent=23 // pred_fallthru
          _
        // Predicated region
        $region33: #{tpu_custom_call.1} parent=23 // pred_check
          %p328 = pneg %p126
        $region34: #{tpu_custom_call.1} parent=23 // pred_check_branch
          %330 = sbr.rel (%p328) target = $region36
        $region35: #{tpu_custom_call.1} parent=23 // pred_region
          %p331 = scmp.lt.s32.totalorder %s24, 3
          %s332 = scalar_select %p331, %s24, 3
          %s333 = smul.addr %s332, 4
          %s334 = smul.addr %s333, 4
          %s335 = scalar_lea.vmem %s3, %s334
        $region36: #{tpu_custom_call.1} parent=23 // pred_fallthru
          _
        // Predicated region
        $region37: #{tpu_custom_call.1} parent=23 // pred_check
          %p336 = pneg %p152
        $region38: #{tpu_custom_call.1} parent=23 // pred_check_branch
          %338 = sbr.rel (%p336) target = $region40
        $region39: #{tpu_custom_call.1} parent=23 // pred_region
          %p339 = scmp.lt.s32.totalorder %s24, 3
          %s340 = scalar_select %p339, %s24, 3
          %s341 = scalar_lea.vmem %s4, %s340
        $region40: #{tpu_custom_call.1} parent=23 // pred_fallthru
          _
        // Predicated region
        $region41: #{tpu_custom_call.1} parent=23 // pred_check
          %p342 = pneg %p178
        $region42: #{tpu_custom_call.1} parent=23 // pred_check_branch
          %344 = sbr.rel (%p342) target = $region44
        $region43: #{tpu_custom_call.1} parent=23 // pred_region
          %p345 = scmp.lt.s32.totalorder %s24, 3
          %s346 = scalar_select %p345, %s24, 3
          %s347 = smul.addr %s346, 4
          %s348 = smul.addr %s347, 4
          %s349 = scalar_lea.vmem %s5, %s348
        $region44: #{tpu_custom_call.1} parent=23 // pred_fallthru
          _
        // Predicated region
        $region45: #{tpu_custom_call.1} parent=23 // pred_check
          %p350 = pneg %p204
        $region46: #{tpu_custom_call.1} parent=23 // pred_check_branch
          %352 = sbr.rel (%p350) target = $region48
        $region47: #{tpu_custom_call.1} parent=23 // pred_region
          %p353 = scmp.lt.s32.totalorder %s24, 3
          %s354 = scalar_select %p353, %s24, 3
          %s355 = scalar_lea.vmem %s6, %s354
        $region48: #{tpu_custom_call.1} parent=23 // pred_fallthru
          _
        // Predicated region
        $region49: #{tpu_custom_call.1} parent=23 // pred_check
          %p356 = pneg %p230
        $region50: #{tpu_custom_call.1} parent=23 // pred_check_branch
          %358 = sbr.rel (%p356) target = $region52
        $region51: #{tpu_custom_call.1} parent=23 // pred_region
          %p359 = scmp.lt.s32.totalorder %s24, 3
          %s360 = scalar_select %p359, %s24, 3
          %s361 = smul.addr %s360, 4
          %s362 = scalar_lea.vmem %s7, %s361
        $region52: #{tpu_custom_call.1} parent=23 // pred_fallthru
          _
      $region24: #{tpu_custom_call.1} parent=5 // pred_fallthru
        _
      %p363 = scmp.le.s32.totalorder 1, %s16
      %p364 = scmp.lt.s32.totalorder %s16, 5
      %p365 = pnand %p363, %p364
      %p366 = pneg %p365
      // Predicated region
      $region53: #{tpu_custom_call.1} parent=5 // pred_check
        _
      $region54: #{tpu_custom_call.1} parent=5 // pred_check_branch
        %368 = sbr.rel (%p365) target = $region56
      $region55: #{tpu_custom_call.1} parent=5 // pred_region
        %s369 = ssub.s32 %s16, 1
        %s370 = smul.u32 2, %s25
        %p371 = scmp.lt.s32.totalorder %s370, 1
        %s372 = scalar_select %p371, %s370, 1
        %s373 = smul.addr %s372, 4
        %s374 = scalar_lea.vmem %s0, %s373
        %p375 = pneg %p54
        %p376 = pneg %p51
        %p377 = scmp.lt.s32.totalorder %s26, 3
        %s378 = scalar_select %p377, %s26, 3
        %s379 = smul.addr %s378, 4
        %s380 = smul.addr %s379, 4
        %s381 = scalar_lea.vmem %s1, %s380
        %p382 = pneg %p80
        %p383 = pneg %p77
        %p384 = scmp.lt.s32.totalorder %s26, 3
        %s385 = scalar_select %p384, %s26, 3
        %s386 = scalar_lea.vmem %s2, %s385
        %p387 = pneg %p106
        %p388 = pneg %p103
        %p389 = scmp.lt.s32.totalorder %s26, 3
        %s390 = scalar_select %p389, %s26, 3
        %s391 = smul.addr %s390, 4
        %s392 = smul.addr %s391, 4
        %s393 = scalar_lea.vmem %s3, %s392
        %p394 = pneg %p132
        %p395 = pneg %p129
        %p396 = scmp.lt.s32.totalorder %s26, 3
        %s397 = scalar_select %p396, %s26, 3
        %s398 = scalar_lea.vmem %s4, %s397
        %p399 = pneg %p158
        %p400 = pneg %p155
        %p401 = scmp.lt.s32.totalorder %s26, 3
        %s402 = scalar_select %p401, %s26, 3
        %s403 = smul.addr %s402, 4
        %s404 = smul.addr %s403, 4
        %s405 = scalar_lea.vmem %s5, %s404
        %p406 = pneg %p184
        %p407 = pneg %p181
        %p408 = scmp.lt.s32.totalorder %s26, 3
        %s409 = scalar_select %p408, %s26, 3
        %s410 = scalar_lea.vmem %s6, %s409
        %p411 = pneg %p210
        %p412 = pneg %p207
        %p413 = scmp.lt.s32.totalorder %s26, 3
        %s414 = scalar_select %p413, %s26, 3
        %s415 = smul.addr %s414, 4
        %s416 = scalar_lea.vmem %s7, %s415
        %p417 = pneg %p236
        %p418 = pneg %p233
        %p419 = pneg %p257
        %p420 = pneg %p254
        %p421 = pneg %p283
        %p422 = pneg %p280
        %s423 = smul.u32 2, %s25
        %p424 = scmp.lt.s32.totalorder %s423, 1
        %s425 = scalar_select %p424, %s423, 1
        %s426 = smul.addr %s425, 4
        %s427 = scalar_lea.vmem %s0, %s426
        %s428 = smul.u32 2, %s25
        %p429 = scmp.lt.s32.totalorder %s26, 3
        %s430 = scalar_select %p429, %s26, 3
        %s431 = smul.addr %s430, 4
        %s432 = smul.addr %s431, 4
        %s433 = scalar_lea.vmem %s1, %s432
        %p434 = scmp.lt.s32.totalorder %s26, 3
        %s435 = scalar_select %p434, %s26, 3
        %s436 = scalar_lea.vmem %s2, %s435
        %p437 = scmp.lt.s32.totalorder %s26, 3
        %s438 = scalar_select %p437, %s26, 3
        %s439 = smul.addr %s438, 4
        %s440 = smul.addr %s439, 4
        %s441 = scalar_lea.vmem %s3, %s440
        %p442 = scmp.lt.s32.totalorder %s26, 3
        %s443 = scalar_select %p442, %s26, 3
        %s444 = scalar_lea.vmem %s4, %s443
        %p445 = scmp.lt.s32.totalorder %s26, 3
        %s446 = scalar_select %p445, %s26, 3
        %s447 = smul.addr %s446, 4
        %s448 = smul.addr %s447, 4
        %s449 = scalar_lea.vmem %s5, %s448
        %p450 = scmp.lt.s32.totalorder %s26, 3
        %s451 = scalar_select %p450, %s26, 3
        %s452 = scalar_lea.vmem %s6, %s451
        %p453 = scmp.lt.s32.totalorder %s26, 3
        %s454 = scalar_select %p453, %s26, 3
        %s455 = smul.addr %s454, 4
        %s456 = scalar_lea.vmem %s7, %s455
        %s457 = smul.u32 2, %s25
        %v459 = vld [vmem:[%s427] sm:$0xf]
        %v460 = vld [vmem:[%s427 + $0x4] sm:$0xf]
        %v461 = vld [vmem:[%s433] sm:$0xf]
        %v462 = vld [vmem:[%s433 + $0x4] sm:$0xf]
        %v463 = vld [vmem:[%s433 + $0x8] sm:$0xf]
        %v464 = vld [vmem:[%s433 + $0xc] sm:$0xf]
        %v465 = vld [vmem:[%s436] sm:$0x1]
        %v467 = vlaneseq
        %v468 = vshrl.u32 %v467, 7
        %v469 = vsub.s32 0, %v468
        %v470 = vrot.slane %v465, %v469
        %v474 = vunpack.c.l.b16 %v459
        %v475 = vunpack.c.l.b16 %v460
        %v476 = vpack.c.b16 %v475, %v474
        %v481 = vunpack.c.l.b16 %v461
        %v482 = vunpack.c.l.b16 %v462
        %v483 = vunpack.c.l.b16 %v463
        %v484 = vunpack.c.l.b16 %v464
        %v485 = vpack.c.b16 %v482, %v481
        %v486 = vpack.c.b16 %v484, %v483
        %vm489 = vcmask 261120
        %v491 = vsel %vm489, %v476, 0
        %493 = vmatprep.subr.bf16.mxu0 0
        %494 = vmatpush1.bf16.msra.mxu0 0
        %495 = vmatprep.subr.bf16.mxu0 0
        %496 = vmatpush1.bf16.msra.mxu0 0
        %497 = vmatprep.subr.bf16.mxu0 0
        %498 = vmatpush1.bf16.msra.mxu0 0
        %499 = vmatprep.subr.bf16.mxu0 0
        %500 = vmatpush1.bf16.msra.mxu0 0
        %501 = vmatprep.subr.bf16.mxu0 0
        %502 = vmatpush1.bf16.msra.mxu0 0
        %503 = vmatprep.subr.bf16.mxu0 0
        %504 = vmatpush1.bf16.msra.mxu0 0
        %505 = vmatprep.subr.bf16.mxu0 0
        %506 = vmatpush1.bf16.msra.mxu0 %v486
        %507 = vmatprep.subr.bf16.mxu0 0
        %508 = vmatpush1.bf16.msra.mxu0 %v485
        %509 = vmatprep.subr.bf16.mxu0 0
        %510 = vmatpush2.bf16.msra.mxu0 0
        %511 = vmatprep.subr.bf16.mxu0 0
        %512 = vmatpush2.bf16.msra.mxu0 0
        %513 = vmatprep.subr.bf16.mxu0 0
        %514 = vmatpush2.bf16.msra.mxu0 0
        %515 = vmatprep.subr.bf16.mxu0 0
        %516 = vmatpush2.bf16.msra.mxu0 0
        %517 = vmatprep.subr.bf16.mxu0 0
        %518 = vmatpush2.bf16.msra.mxu0 0
        %519 = vmatprep.subr.bf16.mxu0 0
        %520 = vmatpush2.bf16.msra.mxu0 0
        %521 = vmatprep.subr.bf16.mxu0 0
        %522 = vmatpush2.bf16.msra.mxu0 0
        %523 = vmatprep.subr.bf16.mxu0 0
        %524 = vmatpush2.bf16.msra.mxu0 0
        %525 = vmatprep.mubr.bf16.mxu0 0
        %526 = vmatmul.mubr.bf16.gmra.mxu0 %v491
        %v527 = vpop.f32.mrf.mxu0
        %v528 = vadd.f32 %v470, %v527
        %v529 = vpop.f32.mrf.mxu0
        %v530 = vpop.f32.mrf.mxu0
        %v531 = vadd.f32 %v470, %v530
        %v532 = vpop.f32.mrf.mxu0
        %533 = vdwg.mxu0
        %v534 = vld [vmem:[%s441] sm:$0xf]
        %v535 = vld [vmem:[%s441 + $0x4] sm:$0xf]
        %v536 = vld [vmem:[%s441 + $0x8] sm:$0xf]
        %v537 = vld [vmem:[%s441 + $0xc] sm:$0xf]
        %v538 = vld [vmem:[%s444] sm:$0x1]
        %v540 = vlaneseq
        %v541 = vshrl.u32 %v540, 7
        %v542 = vsub.s32 0, %v541
        %v543 = vrot.slane %v538, %v542
        %v549 = vunpack.c.l.b16 %v534
        %v550 = vunpack.c.l.b16 %v535
        %v551 = vunpack.c.l.b16 %v536
        %v552 = vunpack.c.l.b16 %v537
        %v553 = vpack.c.b16 %v550, %v549
        %v554 = vpack.c.b16 %v552, %v551
        %557 = vmatprep.subr.bf16.mxu0 0
        %558 = vmatpush1.bf16.msra.mxu0 0
        %559 = vmatprep.subr.bf16.mxu0 0
        %560 = vmatpush1.bf16.msra.mxu0 0
        %561 = vmatprep.subr.bf16.mxu0 0
        %562 = vmatpush1.bf16.msra.mxu0 0
        %563 = vmatprep.subr.bf16.mxu0 0
        %564 = vmatpush1.bf16.msra.mxu0 0
        %565 = vmatprep.subr.bf16.mxu0 0
        %566 = vmatpush1.bf16.msra.mxu0 0
        %567 = vmatprep.subr.bf16.mxu0 0
        %568 = vmatpush1.bf16.msra.mxu0 0
        %569 = vmatprep.subr.bf16.mxu0 0
        %570 = vmatpush1.bf16.msra.mxu0 %v554
        %571 = vmatprep.subr.bf16.mxu0 0
        %572 = vmatpush1.bf16.msra.mxu0 %v553
        %573 = vmatprep.subr.bf16.mxu0 0
        %574 = vmatpush2.bf16.msra.mxu0 0
        %575 = vmatprep.subr.bf16.mxu0 0
        %576 = vmatpush2.bf16.msra.mxu0 0
        %577 = vmatprep.subr.bf16.mxu0 0
        %578 = vmatpush2.bf16.msra.mxu0 0
        %579 = vmatprep.subr.bf16.mxu0 0
        %580 = vmatpush2.bf16.msra.mxu0 0
        %581 = vmatprep.subr.bf16.mxu0 0
        %582 = vmatpush2.bf16.msra.mxu0 0
        %583 = vmatprep.subr.bf16.mxu0 0
        %584 = vmatpush2.bf16.msra.mxu0 0
        %585 = vmatprep.subr.bf16.mxu0 0
        %586 = vmatpush2.bf16.msra.mxu0 0
        %587 = vmatprep.subr.bf16.mxu0 0
        %588 = vmatpush2.bf16.msra.mxu0 0
        %589 = vmatprep.mubr.bf16.mxu0 0
        %590 = vmatmul.mubr.bf16.gmra.mxu0 %v491
        %v591 = vpop.f32.mrf.mxu0
        %v592 = vadd.f32 %v543, %v591
        %v593 = vpop.f32.mrf.mxu0
        %v594 = vpop.f32.mrf.mxu0
        %v595 = vadd.f32 %v543, %v594
        %v596 = vpop.f32.mrf.mxu0
        %597 = vdwg.mxu0
        %v598 = vld [vmem:[%s449] sm:$0xf]
        %v599 = vld [vmem:[%s449 + $0x4] sm:$0xf]
        %v600 = vld [vmem:[%s449 + $0x8] sm:$0xf]
        %v601 = vld [vmem:[%s449 + $0xc] sm:$0xf]
        %v602 = vld [vmem:[%s452] sm:$0x1]
        %v604 = vlaneseq
        %v605 = vshrl.u32 %v604, 7
        %v606 = vsub.s32 0, %v605
        %v607 = vrot.slane %v602, %v606
        %v613 = vunpack.c.l.b16 %v598
        %v614 = vunpack.c.l.b16 %v599
        %v615 = vunpack.c.l.b16 %v600
        %v616 = vunpack.c.l.b16 %v601
        %v617 = vpack.c.b16 %v614, %v613
        %v618 = vpack.c.b16 %v616, %v615
        %621 = vmatprep.subr.bf16.mxu0 0
        %622 = vmatpush1.bf16.msra.mxu0 0
        %623 = vmatprep.subr.bf16.mxu0 0
        %624 = vmatpush1.bf16.msra.mxu0 0
        %625 = vmatprep.subr.bf16.mxu0 0
        %626 = vmatpush1.bf16.msra.mxu0 0
        %627 = vmatprep.subr.bf16.mxu0 0
        %628 = vmatpush1.bf16.msra.mxu0 0
        %629 = vmatprep.subr.bf16.mxu0 0
        %630 = vmatpush1.bf16.msra.mxu0 0
        %631 = vmatprep.subr.bf16.mxu0 0
        %632 = vmatpush1.bf16.msra.mxu0 0
        %633 = vmatprep.subr.bf16.mxu0 0
        %634 = vmatpush1.bf16.msra.mxu0 %v618
        %635 = vmatprep.subr.bf16.mxu0 0
        %636 = vmatpush1.bf16.msra.mxu0 %v617
        %637 = vmatprep.subr.bf16.mxu0 0
        %638 = vmatpush2.bf16.msra.mxu0 0
        %639 = vmatprep.subr.bf16.mxu0 0
        %640 = vmatpush2.bf16.msra.mxu0 0
        %641 = vmatprep.subr.bf16.mxu0 0
        %642 = vmatpush2.bf16.msra.mxu0 0
        %643 = vmatprep.subr.bf16.mxu0 0
        %644 = vmatpush2.bf16.msra.mxu0 0
        %645 = vmatprep.subr.bf16.mxu0 0
        %646 = vmatpush2.bf16.msra.mxu0 0
        %647 = vmatprep.subr.bf16.mxu0 0
        %648 = vmatpush2.bf16.msra.mxu0 0
        %649 = vmatprep.subr.bf16.mxu0 0
        %650 = vmatpush2.bf16.msra.mxu0 0
        %651 = vmatprep.subr.bf16.mxu0 0
        %652 = vmatpush2.bf16.msra.mxu0 0
        %653 = vmatprep.mubr.bf16.mxu0 0
        %654 = vmatmul.mubr.bf16.gmra.mxu0 %v491
        %v655 = vpop.f32.mrf.mxu0
        %v656 = vadd.f32 %v607, %v655
        %v657 = vpop.f32.mrf.mxu0
        %v658 = vpop.f32.mrf.mxu0
        %v659 = vadd.f32 %v607, %v658
        %v660 = vpop.f32.mrf.mxu0
        %661 = vdwg.mxu0
        %v662 = vpack.c.bf16 %v656, %v656
        %v663 = vpack.c.bf16 %v659, %v659
        %v664 = vpack.c.bf16 %v528, %v528
        %v665 = vpack.c.bf16 %v531, %v531
        %v666 = vpack.c.bf16 %v592, %v592
        %v667 = vpack.c.bf16 %v595, %v595
        %vm668 = vcmask 64512
        %v670 = vsel %vm668, %v664, 0
        %v673 = vsel %vm668, %v666, 0
        %675 = vmatprep.subr.bf16.mxu0 0
        %676 = vmatpush1.bf16.xpose.msra.mxu0 0
        %677 = vmatprep.subr.bf16.mxu0 0
        %678 = vmatpush1.bf16.xpose.msra.mxu0 0
        %679 = vmatprep.subr.bf16.mxu0 0
        %680 = vmatpush1.bf16.xpose.msra.mxu0 0
        %681 = vmatprep.subr.bf16.mxu0 0
        %682 = vmatpush1.bf16.xpose.msra.mxu0 0
        %683 = vmatprep.subr.bf16.mxu0 0
        %684 = vmatpush1.bf16.xpose.msra.mxu0 0
        %685 = vmatprep.subr.bf16.mxu0 0
        %686 = vmatpush1.bf16.xpose.msra.mxu0 0
        %687 = vmatprep.subr.bf16.mxu0 0
        %688 = vmatpush1.bf16.xpose.msra.mxu0 0
        %689 = vmatprep.subr.bf16.mxu0 0
        %690 = vmatpush1.bf16.xpose.msra.mxu0 %v673
        %691 = vmatprep.subr.bf16.mxu0 0
        %692 = vmatpush2.bf16.xpose.msra.mxu0 0
        %693 = vmatprep.subr.bf16.mxu0 0
        %694 = vmatpush2.bf16.xpose.msra.mxu0 0
        %695 = vmatprep.subr.bf16.mxu0 0
        %696 = vmatpush2.bf16.xpose.msra.mxu0 0
        %697 = vmatprep.subr.bf16.mxu0 0
        %698 = vmatpush2.bf16.xpose.msra.mxu0 0
        %699 = vmatprep.subr.bf16.mxu0 0
        %700 = vmatpush2.bf16.xpose.msra.mxu0 0
        %701 = vmatprep.subr.bf16.mxu0 0
        %702 = vmatpush2.bf16.xpose.msra.mxu0 0
        %703 = vmatprep.subr.bf16.mxu0 0
        %704 = vmatpush2.bf16.xpose.msra.mxu0 0
        %705 = vmatprep.subr.bf16.mxu0 0
        %706 = vmatpush2.bf16.xpose.msra.mxu0 0
        %707 = vmatprep.mubr.bf16.mxu0 0
        %708 = vmatmul.mubr.bf16.gmra.mxu0 %v670
        %v709 = vpop.f32.mrf.mxu0
        %v710 = vadd.f32 0.0, %v709
        %v711 = vpop.f32.mrf.mxu0
        %v712 = vpop.f32.mrf.mxu0
        %v713 = vpop.f32.mrf.mxu0
        %714 = vdwg.mxu0
        %v716 = vsel %vm668, %v665, 0
        %v719 = vsel %vm668, %v667, 0
        %721 = vmatprep.subr.bf16.mxu0 0
        %722 = vmatpush1.bf16.xpose.msra.mxu0 0
        %723 = vmatprep.subr.bf16.mxu0 0
        %724 = vmatpush1.bf16.xpose.msra.mxu0 0
        %725 = vmatprep.subr.bf16.mxu0 0
        %726 = vmatpush1.bf16.xpose.msra.mxu0 0
        %727 = vmatprep.subr.bf16.mxu0 0
        %728 = vmatpush1.bf16.xpose.msra.mxu0 0
        %729 = vmatprep.subr.bf16.mxu0 0
        %730 = vmatpush1.bf16.xpose.msra.mxu0 0
        %731 = vmatprep.subr.bf16.mxu0 0
        %732 = vmatpush1.bf16.xpose.msra.mxu0 0
        %733 = vmatprep.subr.bf16.mxu0 0
        %734 = vmatpush1.bf16.xpose.msra.mxu0 0
        %735 = vmatprep.subr.bf16.mxu0 0
        %736 = vmatpush1.bf16.xpose.msra.mxu0 %v719
        %737 = vmatprep.subr.bf16.mxu0 0
        %738 = vmatpush2.bf16.xpose.msra.mxu0 0
        %739 = vmatprep.subr.bf16.mxu0 0
        %740 = vmatpush2.bf16.xpose.msra.mxu0 0
        %741 = vmatprep.subr.bf16.mxu0 0
        %742 = vmatpush2.bf16.xpose.msra.mxu0 0
        %743 = vmatprep.subr.bf16.mxu0 0
        %744 = vmatpush2.bf16.xpose.msra.mxu0 0
        %745 = vmatprep.subr.bf16.mxu0 0
        %746 = vmatpush2.bf16.xpose.msra.mxu0 0
        %747 = vmatprep.subr.bf16.mxu0 0
        %748 = vmatpush2.bf16.xpose.msra.mxu0 0
        %749 = vmatprep.subr.bf16.mxu0 0
        %750 = vmatpush2.bf16.xpose.msra.mxu0 0
        %751 = vmatprep.subr.bf16.mxu0 0
        %752 = vmatpush2.bf16.xpose.msra.mxu0 0
        %753 = vmatprep.mubr.bf16.mxu0 0
        %754 = vmatmul.mubr.bf16.gmra.mxu0 %v716
        %v755 = vpop.f32.mrf.mxu0
        %v756 = vadd.f32 0.0, %v755
        %v757 = vpop.f32.mrf.mxu0
        %v758 = vpop.f32.mrf.mxu0
        %v759 = vpop.f32.mrf.mxu0
        %760 = vdwg.mxu0
        %v761 = vsel %vm668, %v710, -inf
        %762 = vmax.xlane.f32.xlu0 %v761
        %v763 = vpop.xlane.xlu0 %762
        %v764 = vsel %vm668, %v756, -inf
        %765 = vmax.xlane.f32.xlu0 %v764
        %v766 = vpop.xlane.xlu0 %765
        %v767 = vsub.f32 %v710, %v763
        %v768 = vsub.f32 %v756, %v766
        %v769 = vmul.f32 %v767, 1.442695
        %v770 = vpow.pop %v769
        %v771 = vmul.f32 %v768, 1.442695
        %v772 = vpow.pop %v771
        %v773 = vsel %vm668, %v770, 0.0
        %774 = vadd.xlane.f32.xlu0 %v773
        %v775 = vpop.xlane.xlu0 %774
        %v776 = vsel %vm668, %v772, 0.0
        %777 = vadd.xlane.f32.xlu0 %v776
        %v778 = vpop.xlane.xlu0 %777
        %v779 = vpack.c.bf16 %v770, %v770
        %v780 = vpack.c.bf16 %v772, %v772
        %v782 = vsel %vm668, %v779, 0
        %vm784 = vcmask 1043456
        %v786 = vsel %vm784, %v662, 0
        %788 = vmatprep.subr.bf16.mxu0 0
        %789 = vmatpush1.bf16.msra.mxu0 0
        %790 = vmatprep.subr.bf16.mxu0 0
        %791 = vmatpush1.bf16.msra.mxu0 0
        %792 = vmatprep.subr.bf16.mxu0 0
        %793 = vmatpush1.bf16.msra.mxu0 0
        %794 = vmatprep.subr.bf16.mxu0 0
        %795 = vmatpush1.bf16.msra.mxu0 0
        %796 = vmatprep.subr.bf16.mxu0 0
        %797 = vmatpush1.bf16.msra.mxu0 0
        %798 = vmatprep.subr.bf16.mxu0 0
        %799 = vmatpush1.bf16.msra.mxu0 0
        %800 = vmatprep.subr.bf16.mxu0 0
        %801 = vmatpush1.bf16.msra.mxu0 0
        %802 = vmatprep.subr.bf16.mxu0 0
        %803 = vmatpush1.bf16.msra.mxu0 %v786
        %804 = vmatprep.subr.bf16.mxu0 0
        %805 = vmatpush2.bf16.msra.mxu0 0
        %806 = vmatprep.subr.bf16.mxu0 0
        %807 = vmatpush2.bf16.msra.mxu0 0
        %808 = vmatprep.subr.bf16.mxu0 0
        %809 = vmatpush2.bf16.msra.mxu0 0
        %810 = vmatprep.subr.bf16.mxu0 0
        %811 = vmatpush2.bf16.msra.mxu0 0
        %812 = vmatprep.subr.bf16.mxu0 0
        %813 = vmatpush2.bf16.msra.mxu0 0
        %814 = vmatprep.subr.bf16.mxu0 0
        %815 = vmatpush2.bf16.msra.mxu0 0
        %816 = vmatprep.subr.bf16.mxu0 0
        %817 = vmatpush2.bf16.msra.mxu0 0
        %818 = vmatprep.subr.bf16.mxu0 0
        %819 = vmatpush2.bf16.msra.mxu0 0
        %820 = vmatprep.mubr.bf16.mxu0 0
        %821 = vmatmul.mubr.bf16.gmra.mxu0 %v782
        %v822 = vpop.f32.mrf.mxu0
        %v823 = vadd.f32 0.0, %v822
        %v824 = vpop.f32.mrf.mxu0
        %v825 = vpop.f32.mrf.mxu0
        %v826 = vpop.f32.mrf.mxu0
        %827 = vdwg.mxu0
        %v829 = vsel %vm668, %v780, 0
        %v832 = vsel %vm784, %v663, 0
        %834 = vmatprep.subr.bf16.mxu0 0
        %835 = vmatpush1.bf16.msra.mxu0 0
        %836 = vmatprep.subr.bf16.mxu0 0
        %837 = vmatpush1.bf16.msra.mxu0 0
        %838 = vmatprep.subr.bf16.mxu0 0
        %839 = vmatpush1.bf16.msra.mxu0 0
        %840 = vmatprep.subr.bf16.mxu0 0
        %841 = vmatpush1.bf16.msra.mxu0 0
        %842 = vmatprep.subr.bf16.mxu0 0
        %843 = vmatpush1.bf16.msra.mxu0 0
        %844 = vmatprep.subr.bf16.mxu0 0
        %845 = vmatpush1.bf16.msra.mxu0 0
        %846 = vmatprep.subr.bf16.mxu0 0
        %847 = vmatpush1.bf16.msra.mxu0 0
        %848 = vmatprep.subr.bf16.mxu0 0
        %849 = vmatpush1.bf16.msra.mxu0 %v832
        %850 = vmatprep.subr.bf16.mxu0 0
        %851 = vmatpush2.bf16.msra.mxu0 0
        %852 = vmatprep.subr.bf16.mxu0 0
        %853 = vmatpush2.bf16.msra.mxu0 0
        %854 = vmatprep.subr.bf16.mxu0 0
        %855 = vmatpush2.bf16.msra.mxu0 0
        %856 = vmatprep.subr.bf16.mxu0 0
        %857 = vmatpush2.bf16.msra.mxu0 0
        %858 = vmatprep.subr.bf16.mxu0 0
        %859 = vmatpush2.bf16.msra.mxu0 0
        %860 = vmatprep.subr.bf16.mxu0 0
        %861 = vmatpush2.bf16.msra.mxu0 0
        %862 = vmatprep.subr.bf16.mxu0 0
        %863 = vmatpush2.bf16.msra.mxu0 0
        %864 = vmatprep.subr.bf16.mxu0 0
        %865 = vmatpush2.bf16.msra.mxu0 0
        %866 = vmatprep.mubr.bf16.mxu0 0
        %867 = vmatmul.mubr.bf16.gmra.mxu0 %v829
        %v868 = vpop.f32.mrf.mxu0
        %v869 = vadd.f32 0.0, %v868
        %v870 = vpop.f32.mrf.mxu0
        %v871 = vpop.f32.mrf.mxu0
        %v872 = vpop.f32.mrf.mxu0
        %873 = vdwg.mxu0
        %v874 = vrcp.pop %v775
        %v875 = vrcp.pop %v778
        %v876 = vmul.f32 %v823, %v874
        %v877 = vmul.f32 %v869, %v875
        %v878 = vpack.c.bf16 %v876, %v876
        %v879 = vpack.c.bf16 %v877, %v877
        %v880 = vld [vmem:[%s456] sm:$0xf]
        %v883 = vunpack.c.l.b16 %v878
        %v884 = vunpack.c.l.b16 %v879
        %v885 = vpack.c.b16 %v884, %v883
        %v887 = vsel %vm668, %v885, 0
        %v890 = vsel %vm784, %v880, 0
        %892 = vmatprep.subr.bf16.mxu0 0
        %893 = vmatpush1.bf16.msra.mxu0 0
        %894 = vmatprep.subr.bf16.mxu0 0
        %895 = vmatpush1.bf16.msra.mxu0 0
        %896 = vmatprep.subr.bf16.mxu0 0
        %897 = vmatpush1.bf16.msra.mxu0 0
        %898 = vmatprep.subr.bf16.mxu0 0
        %899 = vmatpush1.bf16.msra.mxu0 0
        %900 = vmatprep.subr.bf16.mxu0 0
        %901 = vmatpush1.bf16.msra.mxu0 0
        %902 = vmatprep.subr.bf16.mxu0 0
        %903 = vmatpush1.bf16.msra.mxu0 0
        %904 = vmatprep.subr.bf16.mxu0 0
        %905 = vmatpush1.bf16.msra.mxu0 0
        %906 = vmatprep.subr.bf16.mxu0 0
        %907 = vmatpush1.bf16.msra.mxu0 %v890
        %908 = vmatprep.subr.bf16.mxu0 0
        %909 = vmatpush2.bf16.msra.mxu0 0
        %910 = vmatprep.subr.bf16.mxu0 0
        %911 = vmatpush2.bf16.msra.mxu0 0
        %912 = vmatprep.subr.bf16.mxu0 0
        %913 = vmatpush2.bf16.msra.mxu0 0
        %914 = vmatprep.subr.bf16.mxu0 0
        %915 = vmatpush2.bf16.msra.mxu0 0
        %916 = vmatprep.subr.bf16.mxu0 0
        %917 = vmatpush2.bf16.msra.mxu0 0
        %918 = vmatprep.subr.bf16.mxu0 0
        %919 = vmatpush2.bf16.msra.mxu0 0
        %920 = vmatprep.subr.bf16.mxu0 0
        %921 = vmatpush2.bf16.msra.mxu0 0
        %922 = vmatprep.subr.bf16.mxu0 0
        %923 = vmatpush2.bf16.msra.mxu0 0
        %924 = vmatprep.mubr.bf16.mxu0 0
        %925 = vmatmul.mubr.bf16.gmra.mxu0 %v887
        %v926 = vpop.f32.mrf.mxu0
        %v927 = vadd.f32 0.0, %v926
        %v928 = vpop.f32.mrf.mxu0
        %v929 = vpop.f32.mrf.mxu0
        %v930 = vadd.f32 0.0, %v929
        %v931 = vpop.f32.mrf.mxu0
        %932 = vdwg.mxu0
        %p933 = scmp.eq.s32.totalorder %s26, 0
        // Predicated region
        $region57: #{tpu_custom_call.1} parent=55 // pred_check
          %p934 = pneg %p933
        $region58: #{tpu_custom_call.1} parent=55 // pred_check_branch
          %936 = sbr.rel (%p934) target = $region60
        $region59: #{tpu_custom_call.1} parent=55 // pred_region
          %v937 = vld [vmem:[%s8] sm:$0x1]
          %v939 = vlaneseq
          %v940 = vshrl.u32 %v939, 7
          %v941 = vsub.s32 0, %v940
          %v942 = vrot.slane %v937, %v941
          %944 = vst.msk [vmem:[#allocation2] sm:$0xff] %vm489, %v942
          %945 = vst.msk [vmem:[#allocation2 + $0x8] sm:$0xff] %vm489, %v942
        $region60: #{tpu_custom_call.1} parent=55 // pred_fallthru
          _
        %v946 = vld [vmem:[#allocation2] sm:$0xff]
        %v947 = vld [vmem:[#allocation2 + $0x8] sm:$0xff]
        %v948 = vadd.f32 %v946, %v927
        %v949 = vadd.f32 %v947, %v930
        %950 = vst.msk [vmem:[#allocation2] sm:$0xff] %vm489, %v948
        %951 = vst.msk [vmem:[#allocation2 + $0x8] sm:$0xff] %vm489, %v949
        // Predicated region
        $region61: #{tpu_custom_call.1} parent=55 // pred_check
          %p952 = pneg %p280
        $region62: #{tpu_custom_call.1} parent=55 // pred_check_branch
          %954 = sbr.rel (%p952) target = $region64
        $region63: #{tpu_custom_call.1} parent=55 // pred_region
          %s955 = smul.u32 2, %s25
          %s957 = ssub.s32 256, 256
          %958 = vsyncadd [#allocation3], %s957
          %s959 = smul.addr %s955, 128
          %s960 = scalar_lea.hbm %s9, %s959
          %s961 = sshll.u32 [#allocation2], 4
          %s962 = int_to_ptr.vmem [resolvable:$true] %s961
          %967 = dma.vmem_to_hbm [thread:$0]  %s962, 256, %s960, [#allocation3], 128, 128, 8
        $region64: #{tpu_custom_call.1} parent=55 // pred_fallthru
          _
        // Predicated region
        $region65: #{tpu_custom_call.1} parent=55 // pred_check
          %p968 = pneg %p280
        $region66: #{tpu_custom_call.1} parent=55 // pred_check_branch
          %970 = sbr.rel (%p968) target = $region68
        $region67: #{tpu_custom_call.1} parent=55 // pred_region
          %971 = dma.done [#allocation3], 256
        $region68: #{tpu_custom_call.1} parent=55 // pred_fallthru
          _
      $region56: #{tpu_custom_call.1} parent=5 // pred_fallthru
        _
      %p972 = scmp.le.s32.totalorder 2, %s16
      // Predicated region
      $region69: #{tpu_custom_call.1} parent=5 // pred_check
        %p973 = pneg %p972
      $region70: #{tpu_custom_call.1} parent=5 // pred_check_branch
        %975 = sbr.rel (%p973) target = $region72
      $region71: #{tpu_custom_call.1} parent=5 // pred_region
        %s976 = ssub.s32 %s16, 2
      $region72: #{tpu_custom_call.1} parent=5 // pred_fallthru
        _
    $region6: #{tpu_custom_call.1} parent=1 // loop_footer
      %s20 = sadd.s32 1, %s16
    $region7: #{tpu_custom_call.1} parent=1 // loop_footer_branch
      %15 = sbr.rel target = $region3
    $region8: #{tpu_custom_call.1} parent=1 // loop_exit
      _
    %977 = vsyncpa [#allocation3], 1
    %s978 = scalar_lea.sflag [#allocation3], 1
    %979 = vsyncpa %s978, 1

</llo_original>
